<compile_context>
chip_gen: v5e
topology: v5e:2x2
jax: 0.10.0
libtpu: 0.0.40
codegen_flags: <defaults>
</compile_context>

<pallas_src>
from functools import partial

import jax
import jax.numpy as jnp
from jax.experimental import pallas as pl
from jax.experimental.pallas import tpu as pltpu

ALPHA = 0.25      # weight for cross-entropy; (1 - ALPHA) for dice loss
SMOOTH = 1e-08    # dice smoothing factor
_LANES = 128


def _vmem_capacity_bytes():
    try:
        return int(pltpu.get_tpu_info().vmem_capacity_bytes)
    except Exception:
        return 64 * 1024 * 1024          # conservative fallback (v7x per-core VMEM)


def _num_tensorcores():
    """2 on v7x (two TensorCores per chip), 1 on v5e/v6e."""
    try:
        kind = jax.devices()[0].device_kind.lower()
    except Exception:
        return 1
    return 2 if ("v7" in kind or "tpu7" in kind) else 1


def _choose_tile_rows(B, C, R, itemsize, tile_rows):
    """Rows (of 128 lanes, per (b, c) plane) processed per grid step."""
    if tile_rows is None:
        cap = _vmem_capacity_bytes()
        # Leave headroom for Mosaic-internal scratch; never ask for more than 64 MiB.
        budget = min(max(cap - 24 * 1024 * 1024, 8 * 1024 * 1024), 64 * 1024 * 1024)
        # 2 inputs x 2 pipeline buffers (native dtype) + ~8 f32 tile-sized
        # elementwise intermediates the compiler may materialize.
        per_elem = 4 * itemsize + 8 * 4
        tile_rows = (budget // per_elem) // (B * C * _LANES)
    tile_rows = max(8, (int(tile_rows) // 8) * 8)
    if R <= tile_rows:
        # Single row-block.  Keep the block a multiple of 8 rows when possible so the
        # accumulators stay (8, 128)-shaped; tiny R (< 8) uses the full dim instead.
        if R % 8 == 0 or R < 8:
            return R
        return min(tile_rows, (R // 8) * 8)   # -> 2 blocks, 2nd partial + masked
    return tile_rows


def _make_kernel(B, C, rt, R, steps_per_part, acc_rows, needs_mask):
    """One (partition, row-tile) grid point of the streamed reduction."""
    r8 = rt // acc_rows

    def kernel(p_ref, t_ref, ce_ref, inter_ref, union_ref):
        pid = pl.program_id(0)   # partition (v7x TensorCore) axis
        i = pl.program_id(1)     # streamed row-tile axis

        @pl.when(i == 0)
        def _init():
            ce_ref[...] = jnp.zeros_like(ce_ref)
            inter_ref[...] = jnp.zeros_like(inter_ref)
            union_ref[...] = jnp.zeros_like(union_ref)

        p = p_ref[...].astype(jnp.float32)           # (B, C, rt, 128)
        t = t_ref[...].astype(jnp.float32)

        if needs_mask:
            # Ragged tail handled in-kernel: rows past R (partial / duplicated tail
            # blocks, whose contents are unspecified) contribute exactly 0.
            row0 = (pid * steps_per_part + i) * rt
            rows = jax.lax.broadcasted_iota(jnp.int32, (rt, _LANES), 0)
            keep = (rows < (R - row0))[None, None]   # (1, 1, rt, 128)
            p = jnp.where(keep, p, 0.0)
            t = jnp.where(keep, t, 0.0)

        # Cross-entropy with probability targets.  The class reduction (axis=1) is an
        # outer-dim reduction -> pure VPU elementwise across full vregs:
        #   -sum_c t_c log softmax(p)_c = lse * sum_c t_c - (sum_c t_c p_c - m sum_c t_c)
        m = jnp.max(p, axis=1)                               # (B, rt, 128)
        z = p - m[:, None]                                   # (B, C, rt, 128)
        lse = jnp.log(jnp.sum(jnp.exp(z), axis=1))           # (B, rt, 128)
        tsum = jnp.sum(t, axis=1)                            # (B, rt, 128)
        pt = p * t                                           # reused for CE and dice
        spt = jnp.sum(pt, axis=1)                            # (B, rt, 128)
        ce_term = lse * tsum - (spt - m * tsum)              # (B, rt, 128)

        # Deferred reductions: fold rows into sublane-packed resident accumulators
        # with VPU adds only (no per-step cross-lane XLU reduce, no masked tiny
        # stores); the final reduce over (8, 128) happens in JAX after the kernel.
        ce_ref[...] += jnp.sum(
            ce_term.reshape(B * r8, acc_rows, _LANES), axis=0)[None]
        inter_ref[...] += jnp.sum(
            pt.reshape(B * C, r8, acc_rows, _LANES), axis=1)[None]
        union_ref[...] += jnp.sum(
            (p + t).reshape(B * C, r8, acc_rows, _LANES), axis=1)[None]

    return kernel


@partial(jax.jit, static_argnames=("alpha", "smooth", "tile_rows"))
def combined_loss(preds, targets, alpha=ALPHA, smooth=SMOOTH, tile_rows=None):
    """preds, targets: (B, C, H, W); targets are per-pixel class probabilities."""
    B, C, H, W = preds.shape
    hw = H * W
    n_pix = B * hw                        # nn.CrossEntropyLoss 'mean' denominator

    # Lane-align the spatial axis.  When hw % 128 == 0 (common image sizes) this is a
    # free bitcast reshape; otherwise pad only to the next multiple of 128 (zero
    # padding is exact: t=0 -> CE term 0, p=t=0 -> dice terms 0).  Tile / partition
    # remainders never pad — they are masked in-kernel.
    R = pl.cdiv(hw, _LANES)
    p3 = preds.reshape(B, C, hw)
    t3 = targets.reshape(B, C, hw)
    if R * _LANES != hw:
        pad = R * _LANES - hw
        p3 = jnp.pad(p3, ((0, 0), (0, 0), (0, pad)))
        t3 = jnp.pad(t3, ((0, 0), (0, 0), (0, pad)))
    p4 = p3.reshape(B, C, R, _LANES)
    t4 = t3.reshape(B, C, R, _LANES)

    itemsize = max(p4.dtype.itemsize, t4.dtype.itemsize)
    rt = _choose_tile_rows(B, C, R, itemsize, tile_rows)
    total_blocks = pl.cdiv(R, rt)
    # 2-way split only where there are two TensorCores to shard onto (v7x).
    # TODO(synk): if Mosaic's megacore split of the 'parallel' axis does not engage on
    # v7x, switch this axis to CORE_PARALLEL / pl.core_map for an explicit 2-way split.
    npart = 2 if (_num_tensorcores() >= 2 and total_blocks >= 2) else 1
    spp = pl.cdiv(total_blocks, npart)          # grid steps per partition
    needs_mask = (npart * spp * rt != R)

    acc_rows = 8 if rt % 8 == 0 else rt         # sublane rows of the accumulators
    kernel = _make_kernel(B, C, rt, R, spp, acc_rows, needs_mask)

    def in_map(pid, i):
        # Clamp fully-out-of-range trailing steps back onto the last real block; their
        # contribution is zeroed by the in-kernel row mask.
        return (0, 0, jnp.minimum(pid * spp + i, total_blocks - 1), 0)

    vmem_cap = _vmem_capacity_bytes()
    vmem_limit = int(min(vmem_cap * 0.85, 100 * 1024 * 1024))

    ce_parts, inter_parts, union_parts = pl.pallas_call(
        kernel,
        grid=(npart, spp),
        in_specs=[
            pl.BlockSpec((B, C, rt, _LANES), in_map),
            pl.BlockSpec((B, C, rt, _LANES), in_map),
        ],
        out_specs=(
            pl.BlockSpec((1, acc_rows, _LANES), lambda pid, i: (pid, 0, 0)),
            pl.BlockSpec((1, B * C, acc_rows, _LANES), lambda pid, i: (pid, 0, 0, 0)),
            pl.BlockSpec((1, B * C, acc_rows, _LANES), lambda pid, i: (pid, 0, 0, 0)),
        ),
        out_shape=(
            jax.ShapeDtypeStruct((npart, acc_rows, _LANES), jnp.float32),
            jax.ShapeDtypeStruct((npart, B * C, acc_rows, _LANES), jnp.float32),
            jax.ShapeDtypeStruct((npart, B * C, acc_rows, _LANES), jnp.float32),
        ),
        compiler_params=pltpu.CompilerParams(
            dimension_semantics=("parallel", "arbitrary"),
            vmem_limit_bytes=vmem_limit),
        cost_estimate=pl.CostEstimate(
            flops=int(16 * B * C * R * _LANES),
            transcendentals=int((B * C + B) * R * _LANES),
            bytes_accessed=int(2 * B * C * R * _LANES * itemsize)),
    )(p4, t4)

    # Tiny final combine (a few thousand floats) in plain JAX.
    ce = jnp.sum(ce_parts) / n_pix
    inter = jnp.sum(inter_parts, axis=(0, 2, 3)).reshape(B, C)
    union = jnp.sum(union_parts, axis=(0, 2, 3)).reshape(B, C)
    dice = jnp.mean((2.0 * inter + smooth) / (union + smooth))
    return alpha * ce + (1.0 - alpha) * (1.0 - dice)


def _reference(preds, targets, alpha=ALPHA, smooth=SMOOTH):
    # Pure-JAX reference matching nn.CrossEntropyLoss(soft targets) + the module's dice().
    p = preds.astype(jnp.float32)
    t = targets.astype(jnp.float32)
    logp = jax.nn.log_softmax(p, axis=1)
    ce = -jnp.mean(jnp.sum(t * logp, axis=1))
    inter = jnp.sum(p * t, axis=(2, 3))
    union = jnp.sum(p, axis=(2, 3)) + jnp.sum(t, axis=(2, 3))
    dice = jnp.mean((2.0 * inter + smooth) / (union + smooth))
    return alpha * ce + (1.0 - alpha) * (1.0 - dice)


if __name__ == "__main__":
    key = jax.random.PRNGKey(0)

    def make_inputs(k, B, C, H, W, dtype=jnp.float32):
        k1, k2 = jax.random.split(k)
        preds = jax.random.normal(k1, (B, C, H, W), dtype=jnp.float32).astype(dtype)
        labels = jax.random.randint(k2, (B, H, W), 0, C)
        targets = jax.nn.one_hot(labels, C, axis=1, dtype=dtype)   # (B, C, H, W)
        return preds, targets

    ks = jax.random.split(key, 4)

    # Case 1: tiny image -> single row-block (R = 2 rows of 128 lanes).
    p1, t1 = make_inputs(ks[0], 2, 4, 16, 16)
    l1 = jax.block_until_ready(combined_loss(p1, t1))
    assert jnp.allclose(l1, _reference(p1, t1), rtol=1e-5, atol=1e-5), l1

    # Case 2: forced small tile -> streamed grid with a partial (masked) last block.
    p2, t2 = make_inputs(ks[1], 2, 4, 48, 48)            # R = 18 rows, rt = 8
    l2 = jax.block_until_ready(combined_loss(p2, t2, tile_rows=8))
    assert jnp.allclose(l2, _reference(p2, t2), rtol=1e-5, atol=1e-5), l2

    # Case 3: H*W not a multiple of 128 (exercises the lane-pad fallback).
    p3_, t3_ = make_inputs(ks[2], 2, 4, 18, 18)
    l3 = jax.block_until_ready(combined_loss(p3_, t3_))
    assert jnp.allclose(l3, _reference(p3_, t3_), rtol=1e-5, atol=1e-5), l3

    # Case 4: bf16 inputs streamed at half the HBM bytes (cast to f32 in-kernel).
    p4_, t4_ = make_inputs(ks[3], 2, 4, 64, 64, dtype=jnp.bfloat16)
    l4 = jax.block_until_ready(combined_loss(p4_, t4_, tile_rows=8))
    assert jnp.allclose(l4, _reference(p4_, t4_), rtol=1e-4, atol=1e-4), l4

    print("KERNEL_OK")
</pallas_src>

<mosaic_0001>
module attributes {stable_mosaic.version = 11 : i64} {
  func.func @kernel(%arg0: i32, %arg1: i32, %arg2: memref<2x4x2x128xf32, #tpu.memory_space<vmem>>, %arg3: memref<2x4x2x128xf32, #tpu.memory_space<vmem>>, %arg4: memref<1x2x128xf32, #tpu.memory_space<vmem>>, %arg5: memref<1x8x2x128xf32, #tpu.memory_space<vmem>>, %arg6: memref<1x8x2x128xf32, #tpu.memory_space<vmem>>) attributes {dimension_semantics = [#tpu.dimension_semantics<parallel>, #tpu.dimension_semantics<arbitrary>], iteration_bounds = array<i64: 1, 1>, scalar_prefetch = 0 : i64, scratch_operands = 0 : i64, tpu.core_type = #tpu.core_type<tc>, window_params = [{transform_indices = @transform_0, window_bounds = array<i64: 2, 4, 2, 128>}, {transform_indices = @transform_1, window_bounds = array<i64: 2, 4, 2, 128>}, {transform_indices = @transform_2, window_bounds = array<i64: 1, 2, 128>}, {transform_indices = @transform_3, window_bounds = array<i64: 1, 8, 2, 128>}, {transform_indices = @transform_4, window_bounds = array<i64: 1, 8, 2, 128>}]} {
    %c0_i32 = arith.constant 0 : i32
    %0 = arith.cmpi eq, %arg1, %c0_i32 : i32
    %1 = arith.extui %0 : i1 to i32
    %c0_i32_0 = arith.constant 0 : i32
    %2 = arith.cmpi ne, %1, %c0_i32_0 : i32
    scf.if %2 {
      %cst_36 = arith.constant 0.000000e+00 : f32
      %37 = vector.broadcast %cst_36 : f32 to vector<1x2x128xf32>
      %c0_37 = arith.constant 0 : index
      %c0_38 = arith.constant 0 : index
      %c0_39 = arith.constant 0 : index
      %38 = vector.load %arg4[%c0_37, %c0_38, %c0_39] : memref<1x2x128xf32, #tpu.memory_space<vmem>>, vector<1x2x128xf32>
      tpu.vector_store %arg4[%c0_37, %c0_38, %c0_39], %37 {strides = array<i32>} : memref<1x2x128xf32, #tpu.memory_space<vmem>>, vector<1x2x128xf32>,
      %cst_40 = arith.constant 0.000000e+00 : f32
      %39 = vector.broadcast %cst_40 : f32 to vector<1x8x2x128xf32>
      %c0_41 = arith.constant 0 : index
      %c0_42 = arith.constant 0 : index
      %c0_43 = arith.constant 0 : index
      %c0_44 = arith.constant 0 : index
      %40 = vector.load %arg5[%c0_41, %c0_42, %c0_43, %c0_44] : memref<1x8x2x128xf32, #tpu.memory_space<vmem>>, vector<1x8x2x128xf32>
      tpu.vector_store %arg5[%c0_41, %c0_42, %c0_43, %c0_44], %39 {strides = array<i32>} : memref<1x8x2x128xf32, #tpu.memory_space<vmem>>, vector<1x8x2x128xf32>,
      %cst_45 = arith.constant 0.000000e+00 : f32
      %41 = vector.broadcast %cst_45 : f32 to vector<1x8x2x128xf32>
      %c0_46 = arith.constant 0 : index
      %c0_47 = arith.constant 0 : index
      %c0_48 = arith.constant 0 : index
      %c0_49 = arith.constant 0 : index
      %42 = vector.load %arg6[%c0_46, %c0_47, %c0_48, %c0_49] : memref<1x8x2x128xf32, #tpu.memory_space<vmem>>, vector<1x8x2x128xf32>
      tpu.vector_store %arg6[%c0_46, %c0_47, %c0_48, %c0_49], %41 {strides = array<i32>} : memref<1x8x2x128xf32, #tpu.memory_space<vmem>>, vector<1x8x2x128xf32>,
    } else {
    }
    %c0 = arith.constant 0 : index
    %c0_1 = arith.constant 0 : index
    %c0_2 = arith.constant 0 : index
    %c0_3 = arith.constant 0 : index
    %3 = vector.load %arg2[%c0, %c0_1, %c0_2, %c0_3] : memref<2x4x2x128xf32, #tpu.memory_space<vmem>>, vector<2x4x2x128xf32>
    %c0_4 = arith.constant 0 : index
    %c0_5 = arith.constant 0 : index
    %c0_6 = arith.constant 0 : index
    %c0_7 = arith.constant 0 : index
    %4 = vector.load %arg3[%c0_4, %c0_5, %c0_6, %c0_7] : memref<2x4x2x128xf32, #tpu.memory_space<vmem>>, vector<2x4x2x128xf32>
    %cst = arith.constant dense<0xFF800000> : vector<2x2x128xf32>
    %5 = vector.multi_reduction <maximumf>, %3, %cst [1] : vector<2x4x2x128xf32> to vector<2x2x128xf32>
    %6 = vector.shape_cast %5 : vector<2x2x128xf32> to vector<2x1x2x128xf32>
    %7 = vector.broadcast %6 : vector<2x1x2x128xf32> to vector<2x4x2x128xf32>
    %8 = arith.subf %3, %7 : vector<2x4x2x128xf32>
    %9 = math.exp %8 : vector<2x4x2x128xf32>
    %cst_8 = arith.constant dense<0.000000e+00> : vector<2x2x128xf32>
    %10 = vector.multi_reduction <add>, %9, %cst_8 [1] : vector<2x4x2x128xf32> to vector<2x2x128xf32>
    %11 = math.log %10 : vector<2x2x128xf32>
    %cst_9 = arith.constant dense<0.000000e+00> : vector<2x2x128xf32>
    %12 = vector.multi_reduction <add>, %4, %cst_9 [1] : vector<2x4x2x128xf32> to vector<2x2x128xf32>
    %13 = arith.mulf %3, %4 : vector<2x4x2x128xf32>
    %cst_10 = arith.constant dense<0.000000e+00> : vector<2x2x128xf32>
    %14 = vector.multi_reduction <add>, %13, %cst_10 [1] : vector<2x4x2x128xf32> to vector<2x2x128xf32>
    %15 = arith.mulf %11, %12 : vector<2x2x128xf32>
    %16 = arith.mulf %5, %12 : vector<2x2x128xf32>
    %17 = arith.subf %14, %16 : vector<2x2x128xf32>
    %18 = arith.subf %15, %17 : vector<2x2x128xf32>
    %c0_11 = arith.constant 0 : index
    %c0_12 = arith.constant 0 : index
    %c0_13 = arith.constant 0 : index
    %19 = vector.load %arg4[%c0_11, %c0_12, %c0_13] : memref<1x2x128xf32, #tpu.memory_space<vmem>>, vector<1x2x128xf32>
    %cst_14 = arith.constant dense<0.000000e+00> : vector<2x128xf32>
    %20 = vector.multi_reduction <add>, %18, %cst_14 [0] : vector<2x2x128xf32> to vector<2x128xf32>
    %21 = vector.shape_cast %20 : vector<2x128xf32> to vector<1x2x128xf32>
    %22 = arith.addf %19, %21 : vector<1x2x128xf32>
    %c0_15 = arith.constant 0 : index
    %c0_16 = arith.constant 0 : index
    %c0_17 = arith.constant 0 : index
    %23 = vector.load %arg4[%c0_15, %c0_16, %c0_17] : memref<1x2x128xf32, #tpu.memory_space<vmem>>, vector<1x2x128xf32>
    tpu.vector_store %arg4[%c0_15, %c0_16, %c0_17], %22 {strides = array<i32>} : memref<1x2x128xf32, #tpu.memory_space<vmem>>, vector<1x2x128xf32>,
    %c0_18 = arith.constant 0 : index
    %c0_19 = arith.constant 0 : index
    %c0_20 = arith.constant 0 : index
    %c0_21 = arith.constant 0 : index
    %24 = vector.load %arg5[%c0_18, %c0_19, %c0_20, %c0_21] : memref<1x8x2x128xf32, #tpu.memory_space<vmem>>, vector<1x8x2x128xf32>
    %25 = vector.shape_cast %13 : vector<2x4x2x128xf32> to vector<8x1x2x128xf32>
    %cst_22 = arith.constant dense<0.000000e+00> : vector<8x2x128xf32>
    %26 = vector.multi_reduction <add>, %25, %cst_22 [1] : vector<8x1x2x128xf32> to vector<8x2x128xf32>
    %27 = vector.shape_cast %26 : vector<8x2x128xf32> to vector<1x8x2x128xf32>
    %28 = arith.addf %24, %27 : vector<1x8x2x128xf32>
    %c0_23 = arith.constant 0 : index
    %c0_24 = arith.constant 0 : index
    %c0_25 = arith.constant 0 : index
    %c0_26 = arith.constant 0 : index
    %29 = vector.load %arg5[%c0_23, %c0_24, %c0_25, %c0_26] : memref<1x8x2x128xf32, #tpu.memory_space<vmem>>, vector<1x8x2x128xf32>
    tpu.vector_store %arg5[%c0_23, %c0_24, %c0_25, %c0_26], %28 {strides = array<i32>} : memref<1x8x2x128xf32, #tpu.memory_space<vmem>>, vector<1x8x2x128xf32>,
    %c0_27 = arith.constant 0 : index
    %c0_28 = arith.constant 0 : index
    %c0_29 = arith.constant 0 : index
    %c0_30 = arith.constant 0 : index
    %30 = vector.load %arg6[%c0_27, %c0_28, %c0_29, %c0_30] : memref<1x8x2x128xf32, #tpu.memory_space<vmem>>, vector<1x8x2x128xf32>
    %31 = arith.addf %3, %4 : vector<2x4x2x128xf32>
    %32 = vector.shape_cast %31 : vector<2x4x2x128xf32> to vector<8x1x2x128xf32>
    %cst_31 = arith.constant dense<0.000000e+00> : vector<8x2x128xf32>
    %33 = vector.multi_reduction <add>, %32, %cst_31 [1] : vector<8x1x2x128xf32> to vector<8x2x128xf32>
    %34 = vector.shape_cast %33 : vector<8x2x128xf32> to vector<1x8x2x128xf32>
    %35 = arith.addf %30, %34 : vector<1x8x2x128xf32>
    %c0_32 = arith.constant 0 : index
    %c0_33 = arith.constant 0 : index
    %c0_34 = arith.constant 0 : index
    %c0_35 = arith.constant 0 : index
    %36 = vector.load %arg6[%c0_32, %c0_33, %c0_34, %c0_35] : memref<1x8x2x128xf32, #tpu.memory_space<vmem>>, vector<1x8x2x128xf32>
    tpu.vector_store %arg6[%c0_32, %c0_33, %c0_34, %c0_35], %35 {strides = array<i32>} : memref<1x8x2x128xf32, #tpu.memory_space<vmem>>, vector<1x8x2x128xf32>,
    return
  }
  func.func @transform_0(%arg0: i32, %arg1: i32) -> (i32, i32, i32, i32) {
    %c1_i32 = arith.constant 1 : i32
    %0 = arith.muli %arg0, %c1_i32 : i32
    %1 = arith.addi %0, %arg1 : i32
    %c0_i32 = arith.constant 0 : i32
    %2 = arith.minsi %1, %c0_i32 : i32
    %c0_i32_0 = arith.constant 0 : i32
    %c0_i32_1 = arith.constant 0 : i32
    %c0_i32_2 = arith.constant 0 : i32
    %c0_i32_3 = arith.constant 0 : i32
    return %c0_i32_0, %c0_i32_1, %2, %c0_i32_2 : i32, i32, i32, i32
  }
  func.func @transform_1(%arg0: i32, %arg1: i32) -> (i32, i32, i32, i32) {
    %c1_i32 = arith.constant 1 : i32
    %0 = arith.muli %arg0, %c1_i32 : i32
    %1 = arith.addi %0, %arg1 : i32
    %c0_i32 = arith.constant 0 : i32
    %2 = arith.minsi %1, %c0_i32 : i32
    %c0_i32_0 = arith.constant 0 : i32
    %c0_i32_1 = arith.constant 0 : i32
    %c0_i32_2 = arith.constant 0 : i32
    %c0_i32_3 = arith.constant 0 : i32
    return %c0_i32_0, %c0_i32_1, %2, %c0_i32_2 : i32, i32, i32, i32
  }
  func.func @transform_2(%arg0: i32, %arg1: i32) -> (i32, i32, i32) {
    %c0_i32 = arith.constant 0 : i32
    %c0_i32_0 = arith.constant 0 : i32
    %c0_i32_1 = arith.constant 0 : i32
    return %arg0, %c0_i32, %c0_i32_0 : i32, i32, i32
  }
  func.func @transform_3(%arg0: i32, %arg1: i32) -> (i32, i32, i32, i32) {
    %c0_i32 = arith.constant 0 : i32
    %c0_i32_0 = arith.constant 0 : i32
    %c0_i32_1 = arith.constant 0 : i32
    %c0_i32_2 = arith.constant 0 : i32
    return %arg0, %c0_i32, %c0_i32_0, %c0_i32_1 : i32, i32, i32, i32
  }
  func.func @transform_4(%arg0: i32, %arg1: i32) -> (i32, i32, i32, i32) {
    %c0_i32 = arith.constant 0 : i32
    %c0_i32_0 = arith.constant 0 : i32
    %c0_i32_1 = arith.constant 0 : i32
    %c0_i32_2 = arith.constant 0 : i32
    return %arg0, %c0_i32, %c0_i32_0, %c0_i32_1 : i32, i32, i32, i32
  }
}

</mosaic_0001>

<llo_original>
// kernel: combined_loss.1
$region0: #{combined_loss.1}
  #allocation0 [shape = 'u32[]', space=smem, size = 0x4, offset = 0x4, fixed_abs, tag = 'smem constant byte address 0x4 - core index']
  #allocation1 [shape = 'u32[72,128]{1,0:T(1,128)}', space=vmem, size = 0x9000, scoped, tag = 'internal scratch']
  %s0 = inlined_call_operand.vmem [shape: f32[2,4,2,128], index: 0, kind: input, shape index: {}]
  %s1 = inlined_call_operand.vmem [shape: f32[2,4,2,128], index: 1, kind: input, shape index: {}]
  %s2 = inlined_call_operand.vmem [shape: f32[1,2,128], index: 2, kind: output, shape index: {0}]
  %s3 = inlined_call_operand.vmem [shape: f32[1,8,2,128], index: 3, kind: output, shape index: {1}]
  %s4 = inlined_call_operand.vmem [shape: f32[1,8,2,128], index: 4, kind: output, shape index: {2}]
  %5 = xla_tuple %s2, %s3, %s4
  %s6 = sld [smem:[#allocation0]]
  $region38: #{combined_loss.1} parent=0
    _
  %s8 = ssub.s32 1, %s6
  %s9 = scalar_select 0, %s8, %s6
  // Predicated region
  $region2: #{combined_loss.1} parent=0 // pred_check
    _
  $region3: #{combined_loss.1} parent=0 // pred_check_branch
    %11 = sbr.rel (0) target = $region5
  $region4: #{combined_loss.1} parent=0 // pred_region
    %s12 = sadd.s32 0, 0
    %p13 = scmp.lt.s32.totalorder %s12, 0
    %s14 = scalar_select %p13, %s12, 0
    %p15 = scmp.lt.s32.totalorder %s14, 0
    %s16 = scalar_select %p15, %s14, 0
    %s17 = smul.addr %s16, 2
    %s18 = scalar_lea.vmem %s0, %s17
    %s19 = sadd.s32 0, 0
    %p20 = scmp.lt.s32.totalorder %s19, 0
    %s21 = scalar_select %p20, %s19, 0
  $region5: #{combined_loss.1} parent=0 // pred_fallthru
    _
  // Predicated region
  $region6: #{combined_loss.1} parent=0 // pred_check
    _
  $region7: #{combined_loss.1} parent=0 // pred_check_branch
    %23 = sbr.rel (0) target = $region9
  $region8: #{combined_loss.1} parent=0 // pred_region
    %s24 = sadd.s32 0, 0
    %p25 = scmp.lt.s32.totalorder %s24, 0
    %s26 = scalar_select %p25, %s24, 0
    %p27 = scmp.lt.s32.totalorder %s26, 0
    %s28 = scalar_select %p27, %s26, 0
    %s29 = smul.addr %s28, 2
    %s30 = scalar_lea.vmem %s1, %s29
    %s31 = sadd.s32 0, 0
    %p32 = scmp.lt.s32.totalorder %s31, 0
    %s33 = scalar_select %p32, %s31, 0
  $region9: #{combined_loss.1} parent=0 // pred_fallthru
    _
  %s34 = sadd.s32 0, 0
  %p35 = scmp.lt.s32.totalorder %s34, 0
  %s36 = scalar_select %p35, %s34, 0
  %p37 = scmp.lt.s32.totalorder %s36, 0
  %s38 = scalar_select %p37, %s36, 0
  %s39 = smul.addr %s38, 2
  %s40 = scalar_lea.vmem %s0, %s39
  %s41 = sadd.s32 0, 0
  %p42 = scmp.lt.s32.totalorder %s41, 0
  %s43 = scalar_select %p42, %s41, 0
  %p44 = scmp.lt.s32.totalorder %s43, 0
  %s45 = scalar_select %p44, %s43, 0
  %s46 = smul.addr %s45, 2
  %s47 = scalar_lea.vmem %s1, %s46
  %s48 = sadd.s32 0, 0
  %p49 = scmp.lt.s32.totalorder %s48, 0
  %s50 = scalar_select %p49, %s48, 0
  %p51 = scmp.lt.s32.totalorder %s50, 0
  %s52 = scalar_select %p51, %s50, 0
  %s53 = smul.addr %s52, 2
  %s54 = scalar_lea.vmem %s0, %s53
  %s55 = sadd.s32 0, 0
  %p56 = scmp.lt.s32.totalorder %s55, 0
  %s57 = scalar_select %p56, %s55, 0
  %s58 = sadd.s32 0, 0
  %p59 = scmp.lt.s32.totalorder %s58, 0
  %s60 = scalar_select %p59, %s58, 0
  %p61 = scmp.lt.s32.totalorder %s60, 0
  %s62 = scalar_select %p61, %s60, 0
  %s63 = smul.addr %s62, 2
  %s64 = scalar_lea.vmem %s1, %s63
  %s65 = sadd.s32 0, 0
  %p66 = scmp.lt.s32.totalorder %s65, 0
  %s67 = scalar_select %p66, %s65, 0
  %p68 = scmp.eq.s32.totalorder 0, 0
  // Predicated region
  $region10: #{combined_loss.1} parent=0 // pred_check
    %p69 = pneg %p68
  $region11: #{combined_loss.1} parent=0 // pred_check_branch
    %71 = sbr.rel (%p69) target = $region13
  $region12: #{combined_loss.1} parent=0 // pred_region
    %72 = vst [vmem:[%s2] sm:$0x3] 0.0
    %73 = vst [vmem:[%s3] sm:$0x3] 0.0
    %74 = vst [vmem:[%s3 + $0x2] sm:$0x3] 0.0
    %75 = vst [vmem:[%s3 + $0x4] sm:$0x3] 0.0
    %76 = vst [vmem:[%s3 + $0x6] sm:$0x3] 0.0
    %77 = vst [vmem:[%s3 + $0x8] sm:$0x3] 0.0
    %78 = vst [vmem:[%s3 + $0xa] sm:$0x3] 0.0
    %79 = vst [vmem:[%s3 + $0xc] sm:$0x3] 0.0
    %80 = vst [vmem:[%s3 + $0xe] sm:$0x3] 0.0
    %81 = vst [vmem:[%s4] sm:$0x3] 0.0
    %82 = vst [vmem:[%s4 + $0x2] sm:$0x3] 0.0
    %83 = vst [vmem:[%s4 + $0x4] sm:$0x3] 0.0
    %84 = vst [vmem:[%s4 + $0x6] sm:$0x3] 0.0
    %85 = vst [vmem:[%s4 + $0x8] sm:$0x3] 0.0
    %86 = vst [vmem:[%s4 + $0xa] sm:$0x3] 0.0
    %87 = vst [vmem:[%s4 + $0xc] sm:$0x3] 0.0
    %88 = vst [vmem:[%s4 + $0xe] sm:$0x3] 0.0
  $region13: #{combined_loss.1} parent=0 // pred_fallthru
    _
  %v89 = vld [vmem:[%s54] sm:$0x3]
  %v90 = vld [vmem:[%s54 + $0x2] sm:$0x3]
  %v91 = vld [vmem:[%s54 + $0x4] sm:$0x3]
  %v92 = vld [vmem:[%s54 + $0x6] sm:$0x3]
  %v93 = vld [vmem:[%s54 + $0x8] sm:$0x3]
  %v94 = vld [vmem:[%s54 + $0xa] sm:$0x3]
  %v95 = vld [vmem:[%s54 + $0xc] sm:$0x3]
  %v96 = vld [vmem:[%s54 + $0xe] sm:$0x3]
  %v97 = vld [vmem:[%s64] sm:$0x3]
  %v98 = vld [vmem:[%s64 + $0x2] sm:$0x3]
  %v99 = vld [vmem:[%s64 + $0x4] sm:$0x3]
  %v100 = vld [vmem:[%s64 + $0x6] sm:$0x3]
  %v101 = vld [vmem:[%s64 + $0x8] sm:$0x3]
  %v102 = vld [vmem:[%s64 + $0xa] sm:$0x3]
  %v103 = vld [vmem:[%s64 + $0xc] sm:$0x3]
  %v104 = vld [vmem:[%s64 + $0xe] sm:$0x3]
  %vm105 = vcmask 1041408
  %v106 = vsel %vm105, %v89, -inf
  %v107 = vsel %vm105, %v90, -inf
  %v108 = vsel %vm105, %v91, -inf
  %v109 = vmax.f32 %v106, %v108
  %v110 = vsel %vm105, %v92, -inf
  %v111 = vmax.f32 %v107, %v110
  %v112 = vmax.f32 %v109, %v111
  %v113 = vsel %vm105, %v93, -inf
  %v114 = vsel %vm105, %v94, -inf
  %v115 = vsel %vm105, %v95, -inf
  %v116 = vmax.f32 %v113, %v115
  %v117 = vsel %vm105, %v96, -inf
  %v118 = vmax.f32 %v114, %v117
  %v119 = vmax.f32 %v116, %v118
  %v120 = vsub.f32 %v89, %v112
  %v121 = vsub.f32 %v90, %v112
  %v122 = vsub.f32 %v91, %v112
  %v123 = vsub.f32 %v92, %v112
  %v124 = vsub.f32 %v93, %v119
  %v125 = vsub.f32 %v94, %v119
  %v126 = vsub.f32 %v95, %v119
  %v127 = vsub.f32 %v96, %v119
  %v128 = vmul.f32 %v120, 1.442695
  %v129 = vpow.pop %v128
  %v130 = vmul.f32 %v121, 1.442695
  %v131 = vpow.pop %v130
  %v132 = vmul.f32 %v122, 1.442695
  %v133 = vpow.pop %v132
  %v134 = vmul.f32 %v123, 1.442695
  %v135 = vpow.pop %v134
  %v136 = vmul.f32 %v124, 1.442695
  %v137 = vpow.pop %v136
  %v138 = vmul.f32 %v125, 1.442695
  %v139 = vpow.pop %v138
  %v140 = vmul.f32 %v126, 1.442695
  %v141 = vpow.pop %v140
  %v142 = vmul.f32 %v127, 1.442695
  %v143 = vpow.pop %v142
  %v144 = vsel %vm105, %v129, 0.0
  %v145 = vsel %vm105, %v131, 0.0
  %v146 = vadd.f32 %v144, %v145
  %v147 = vsel %vm105, %v133, 0.0
  %v148 = vadd.f32 %v146, %v147
  %v149 = vsel %vm105, %v135, 0.0
  %v150 = vadd.f32 %v148, %v149
  %v151 = vsel %vm105, %v137, 0.0
  %v152 = vsel %vm105, %v139, 0.0
  %v153 = vadd.f32 %v151, %v152
  %v154 = vsel %vm105, %v141, 0.0
  %v155 = vadd.f32 %v153, %v154
  %v156 = vsel %vm105, %v143, 0.0
  %v157 = vadd.f32 %v155, %v156
  %v158 = vlog2.pop %v150
  %v159 = vmul.f32 %v158, 0.6931472
  %v160 = vlog2.pop %v157
  %v161 = vmul.f32 %v160, 0.6931472
  %v162 = vsel %vm105, %v97, 0.0
  %v163 = vsel %vm105, %v98, 0.0
  %v164 = vadd.f32 %v162, %v163
  %v165 = vsel %vm105, %v99, 0.0
  %v166 = vadd.f32 %v164, %v165
  %v167 = vsel %vm105, %v100, 0.0
  %v168 = vadd.f32 %v166, %v167
  %v169 = vsel %vm105, %v101, 0.0
  %v170 = vsel %vm105, %v102, 0.0
  %v171 = vadd.f32 %v169, %v170
  %v172 = vsel %vm105, %v103, 0.0
  %v173 = vadd.f32 %v171, %v172
  %v174 = vsel %vm105, %v104, 0.0
  %v175 = vadd.f32 %v173, %v174
  %v176 = vmul.f32 %v89, %v97
  %v177 = vmul.f32 %v90, %v98
  %v178 = vmul.f32 %v91, %v99
  %v179 = vmul.f32 %v92, %v100
  %v180 = vmul.f32 %v93, %v101
  %v181 = vmul.f32 %v94, %v102
  %v182 = vmul.f32 %v95, %v103
  %v183 = vmul.f32 %v96, %v104
  %v184 = vsel %vm105, %v176, 0.0
  %v185 = vsel %vm105, %v177, 0.0
  %v186 = vadd.f32 %v184, %v185
  %v187 = vsel %vm105, %v178, 0.0
  %v188 = vadd.f32 %v186, %v187
  %v189 = vsel %vm105, %v179, 0.0
  %v190 = vadd.f32 %v188, %v189
  %v191 = vsel %vm105, %v180, 0.0
  %v192 = vsel %vm105, %v181, 0.0
  %v193 = vadd.f32 %v191, %v192
  %v194 = vsel %vm105, %v182, 0.0
  %v195 = vadd.f32 %v193, %v194
  %v196 = vsel %vm105, %v183, 0.0
  %v197 = vadd.f32 %v195, %v196
  %v198 = vmul.f32 %v159, %v168
  %v199 = vmul.f32 %v161, %v175
  %v200 = vmul.f32 %v112, %v168
  %v201 = vmul.f32 %v119, %v175
  %v202 = vsub.f32 %v190, %v200
  %v203 = vsub.f32 %v197, %v201
  %v204 = vsub.f32 %v198, %v202
  %v205 = vsub.f32 %v199, %v203
  %v206 = vld [vmem:[%s2] sm:$0x3]
  %v207 = vsel %vm105, %v204, 0.0
  %v208 = vsel %vm105, %v205, 0.0
  %v209 = vadd.f32 %v207, %v208
  %v210 = vadd.f32 %v206, %v209
  %211 = vst [vmem:[%s2] sm:$0x3] %v210
  %v212 = vld [vmem:[%s3] sm:$0x3]
  %v213 = vld [vmem:[%s3 + $0x2] sm:$0x3]
  %v214 = vld [vmem:[%s3 + $0x4] sm:$0x3]
  %v215 = vld [vmem:[%s3 + $0x6] sm:$0x3]
  %v216 = vld [vmem:[%s3 + $0x8] sm:$0x3]
  %v217 = vld [vmem:[%s3 + $0xa] sm:$0x3]
  %v218 = vld [vmem:[%s3 + $0xc] sm:$0x3]
  %v219 = vld [vmem:[%s3 + $0xe] sm:$0x3]
  %v220 = vadd.f32 %v176, 0.0
  %v221 = vadd.f32 %v177, 0.0
  %v222 = vadd.f32 %v178, 0.0
  %v223 = vadd.f32 %v179, 0.0
  %v224 = vadd.f32 %v180, 0.0
  %v225 = vadd.f32 %v181, 0.0
  %v226 = vadd.f32 %v182, 0.0
  %v227 = vadd.f32 %v183, 0.0
  %v228 = vadd.f32 %v212, %v220
  %v229 = vadd.f32 %v213, %v221
  %v230 = vadd.f32 %v214, %v222
  %v231 = vadd.f32 %v215, %v223
  %v232 = vadd.f32 %v216, %v224
  %v233 = vadd.f32 %v217, %v225
  %v234 = vadd.f32 %v218, %v226
  %v235 = vadd.f32 %v219, %v227
  %236 = vst [vmem:[%s3] sm:$0x3] %v228
  %237 = vst [vmem:[%s3 + $0x2] sm:$0x3] %v229
  %238 = vst [vmem:[%s3 + $0x4] sm:$0x3] %v230
  %239 = vst [vmem:[%s3 + $0x6] sm:$0x3] %v231
  %240 = vst [vmem:[%s3 + $0x8] sm:$0x3] %v232
  %241 = vst [vmem:[%s3 + $0xa] sm:$0x3] %v233
  %242 = vst [vmem:[%s3 + $0xc] sm:$0x3] %v234
  %243 = vst [vmem:[%s3 + $0xe] sm:$0x3] %v235
  %v244 = vld [vmem:[%s4] sm:$0x3]
  %v245 = vld [vmem:[%s4 + $0x2] sm:$0x3]
  %v246 = vld [vmem:[%s4 + $0x4] sm:$0x3]
  %v247 = vld [vmem:[%s4 + $0x6] sm:$0x3]
  %v248 = vld [vmem:[%s4 + $0x8] sm:$0x3]
  %v249 = vld [vmem:[%s4 + $0xa] sm:$0x3]
  %v250 = vld [vmem:[%s4 + $0xc] sm:$0x3]
  %v251 = vld [vmem:[%s4 + $0xe] sm:$0x3]
  %v252 = vadd.f32 %v89, %v97
  %v253 = vadd.f32 %v90, %v98
  %v254 = vadd.f32 %v91, %v99
  %v255 = vadd.f32 %v92, %v100
  %v256 = vadd.f32 %v93, %v101
  %v257 = vadd.f32 %v94, %v102
  %v258 = vadd.f32 %v95, %v103
  %v259 = vadd.f32 %v96, %v104
  %v260 = vadd.f32 %v252, 0.0
  %v261 = vadd.f32 %v253, 0.0
  %v262 = vadd.f32 %v254, 0.0
  %v263 = vadd.f32 %v255, 0.0
  %v264 = vadd.f32 %v256, 0.0
  %v265 = vadd.f32 %v257, 0.0
  %v266 = vadd.f32 %v258, 0.0
  %v267 = vadd.f32 %v259, 0.0
  %v268 = vadd.f32 %v244, %v260
  %v269 = vadd.f32 %v245, %v261
  %v270 = vadd.f32 %v246, %v262
  %v271 = vadd.f32 %v247, %v263
  %v272 = vadd.f32 %v248, %v264
  %v273 = vadd.f32 %v249, %v265
  %v274 = vadd.f32 %v250, %v266
  %v275 = vadd.f32 %v251, %v267
  %276 = vst [vmem:[%s4] sm:$0x3] %v268
  %277 = vst [vmem:[%s4 + $0x2] sm:$0x3] %v269
  %278 = vst [vmem:[%s4 + $0x4] sm:$0x3] %v270
  %279 = vst [vmem:[%s4 + $0x6] sm:$0x3] %v271
  %280 = vst [vmem:[%s4 + $0x8] sm:$0x3] %v272
  %281 = vst [vmem:[%s4 + $0xa] sm:$0x3] %v273
  %282 = vst [vmem:[%s4 + $0xc] sm:$0x3] %v274
  %283 = vst [vmem:[%s4 + $0xe] sm:$0x3] %v275
  // Predicated region
  $region14: #{combined_loss.1} parent=0 // pred_check
    _
  $region15: #{combined_loss.1} parent=0 // pred_check_branch
    %285 = sbr.rel (0) target = $region17
  $region16: #{combined_loss.1} parent=0 // pred_region
    _
  $region17: #{combined_loss.1} parent=0 // pred_fallthru
    _
  // Predicated region
  $region18: #{combined_loss.1} parent=0 // pred_check
    _
  $region19: #{combined_loss.1} parent=0 // pred_check_branch
    %287 = sbr.rel (0) target = $region21
  $region20: #{combined_loss.1} parent=0 // pred_region
    _
  $region21: #{combined_loss.1} parent=0 // pred_fallthru
    _
  // Predicated region
  $region22: #{combined_loss.1} parent=0 // pred_check
    _
  $region23: #{combined_loss.1} parent=0 // pred_check_branch
    %289 = sbr.rel (0) target = $region25
  $region24: #{combined_loss.1} parent=0 // pred_region
    _
  $region25: #{combined_loss.1} parent=0 // pred_fallthru
    _
  // Predicated region
  $region26: #{combined_loss.1} parent=0 // pred_check
    _
  $region27: #{combined_loss.1} parent=0 // pred_check_branch
    %291 = sbr.rel (0) target = $region29
  $region28: #{combined_loss.1} parent=0 // pred_region
    _
  $region29: #{combined_loss.1} parent=0 // pred_fallthru
    _
  // Predicated region
  $region30: #{combined_loss.1} parent=0 // pred_check
    _
  $region31: #{combined_loss.1} parent=0 // pred_check_branch
    %293 = sbr.rel (0) target = $region33
  $region32: #{combined_loss.1} parent=0 // pred_region
    _
  $region33: #{combined_loss.1} parent=0 // pred_fallthru
    _
  // Predicated region
  $region34: #{combined_loss.1} parent=0 // pred_check
    _
  $region35: #{combined_loss.1} parent=0 // pred_check_branch
    %295 = sbr.rel (0) target = $region37
  $region36: #{combined_loss.1} parent=0 // pred_region
    _
  $region37: #{combined_loss.1} parent=0 // pred_fallthru
    _

</llo_original>
